<compile_context>
chip_gen: v6e
topology: v6e:2x2x1
jax: 0.10.0
libtpu: 0.0.40
codegen_flags: <defaults>
</compile_context>

<pallas_src>
import functools

import jax
import jax.numpy as jnp
from jax.experimental import pallas as pl
from jax.experimental.pallas import tpu as pltpu

# Module hyper-parameters (hidden_depth=2 -> 3 Linear layers in utils.mlp)
OBS_DIM = 32
ACTION_DIM = 6
HIDDEN_DIM = 64
LOG_STD_MIN = -5.0
LOG_STD_MAX = 2.0
BATCH = 8


def _actor_kernel(obs_ref, w1_ref, b1_ref, w2_ref, b2_ref, w3_ref, b3_ref,
                  out_ref, *, action_dim):
    """One batch tile: full trunk MLP + fused mu/std head epilogue."""
    compute_dtype = w1_ref.dtype
    x = obs_ref[...].astype(compute_dtype)

    # Layer 1: Linear (MXU, f32 accumulate) + bias + ReLU (f32)
    h = jnp.dot(x, w1_ref[...], preferred_element_type=jnp.float32) + b1_ref[...]
    h = jnp.maximum(h, 0.0)

    # Layer 2: Linear + ReLU
    h = jnp.dot(h.astype(compute_dtype), w2_ref[...],
                preferred_element_type=jnp.float32) + b2_ref[...]
    h = jnp.maximum(h, 0.0)

    # Fused head: one matmul producing [mu | log_std | zero-pad] (128 lanes).
    out = jnp.dot(h.astype(compute_dtype), w3_ref[...],
                  preferred_element_type=jnp.float32) + b3_ref[...]

    # Epilogue in f32. log_std lanes: tanh -> rescale to bounds -> exp = std.
    lane = jax.lax.broadcasted_iota(jnp.int32, out.shape, dimension=1)
    is_log_std = jnp.logical_and(lane >= action_dim, lane < 2 * action_dim)
    log_std = LOG_STD_MIN + 0.5 * (LOG_STD_MAX - LOG_STD_MIN) * (jnp.tanh(out) + 1.0)
    std = jnp.exp(log_std)
    # Single lane-dense store: mu lanes keep the raw linear output, log_std
    # lanes hold std, padding lanes hold don't-care values (sliced off outside).
    out_ref[...] = jnp.where(is_log_std, std, out)


def diag_gaussian_actor_forward(obs, params, *, compute_dtype=jnp.float32,
                                block_b=128):
    """Returns (mu, std) of the SquashedNormal policy distribution.

    compute_dtype: dtype of the matmul operands (jnp.bfloat16 recommended on
    v6e/v7x at large batch); accumulation, bias adds and the tanh/exp epilogue
    are always f32.
    """
    w1, b1, w2, b2, w3, b3 = params
    B, obs_dim = obs.shape
    hidden = w1.shape[1]
    two_act = w3.shape[1]
    action_dim = two_act // 2

    # Pad the fused head to a full 128-lane slab -> unmasked lane-dense stores.
    head_pad = max(128, pl.cdiv(two_act, 128) * 128)
    w3p = jnp.zeros((hidden, head_pad), w3.dtype).at[:, :two_act].set(w3)
    b3p = jnp.zeros((1, head_pad), b3.dtype).at[:, :two_act].set(b3)

    # Pad batch to a multiple of the batch tile.
    n_blocks = pl.cdiv(B, block_b)
    b_pad = n_blocks * block_b
    obs_p = obs if b_pad == B else jnp.pad(obs, ((0, b_pad - B), (0, 0)))

    # Matmul operands in compute_dtype; biases stay f32 (added post-accumulate).
    obs_c = obs_p.astype(compute_dtype)
    w1c = w1.astype(compute_dtype)
    w2c = w2.astype(compute_dtype)
    w3c = w3p.astype(compute_dtype)
    b1f = b1.astype(jnp.float32)
    b2f = b2.astype(jnp.float32)
    b3f = b3p.astype(jnp.float32)

    const = lambda i: (0, 0)  # weights: same block every step -> VMEM-resident
    out = pl.pallas_call(
        functools.partial(_actor_kernel, action_dim=action_dim),
        out_shape=jax.ShapeDtypeStruct((b_pad, head_pad), jnp.float32),
        grid=(n_blocks,),
        in_specs=[
            pl.BlockSpec((block_b, obs_dim), lambda i: (i, 0)),   # obs tile
            pl.BlockSpec((obs_dim, hidden), const),               # w1
            pl.BlockSpec((1, hidden), const),                     # b1
            pl.BlockSpec((hidden, hidden), const),                # w2
            pl.BlockSpec((1, hidden), const),                     # b2
            pl.BlockSpec((hidden, head_pad), const),              # w3 (padded)
            pl.BlockSpec((1, head_pad), const),                   # b3 (padded)
        ],
        out_specs=pl.BlockSpec((block_b, head_pad), lambda i: (i, 0)),
        compiler_params=pltpu.CompilerParams(
            dimension_semantics=("parallel",)),  # megacore split on v7x
    )(obs_c, w1c, b1f, w2c, b2f, w3c, b3f)

    mu = out[:B, :action_dim]
    std = out[:B, action_dim:two_act]
    return mu, std


def _reference_forward(obs, params):
    w1, b1, w2, b2, w3, b3 = params
    h = jnp.maximum(obs @ w1 + b1, 0.0)
    h = jnp.maximum(h @ w2 + b2, 0.0)
    out = h @ w3 + b3
    mu, log_std = out[:, :ACTION_DIM], out[:, ACTION_DIM:]
    log_std = jnp.tanh(log_std)
    log_std = LOG_STD_MIN + 0.5 * (LOG_STD_MAX - LOG_STD_MIN) * (log_std + 1.0)
    return mu, jnp.exp(log_std)


def _init_params(key):
    k1, k2, k3 = jax.random.split(key, 3)
    # Deterministic synthetic init (stands in for utils.weight_init / orthogonal).
    w1 = jax.random.normal(k1, (OBS_DIM, HIDDEN_DIM), jnp.float32) * (1.0 / OBS_DIM ** 0.5)
    b1 = jnp.zeros((1, HIDDEN_DIM), jnp.float32)
    w2 = jax.random.normal(k2, (HIDDEN_DIM, HIDDEN_DIM), jnp.float32) * (1.0 / HIDDEN_DIM ** 0.5)
    b2 = jnp.zeros((1, HIDDEN_DIM), jnp.float32)
    w3 = jax.random.normal(k3, (HIDDEN_DIM, 2 * ACTION_DIM), jnp.float32) * (1.0 / HIDDEN_DIM ** 0.5)
    b3 = jnp.zeros((1, 2 * ACTION_DIM), jnp.float32)
    return w1, b1, w2, b2, w3, b3


if __name__ == "__main__":
    key = jax.random.PRNGKey(0)
    k_obs, k_obs2, k_params = jax.random.split(key, 3)
    params = _init_params(k_params)

    fwd_f32 = jax.jit(functools.partial(diag_gaussian_actor_forward,
                                        compute_dtype=jnp.float32))
    fwd_bf16 = jax.jit(functools.partial(diag_gaussian_actor_forward,
                                         compute_dtype=jnp.bfloat16))

    # 1) Small batch (B=8), f32 compute: tight-tolerance correctness check.
    obs = jax.random.normal(k_obs, (BATCH, OBS_DIM), jnp.float32)
    mu, std = fwd_f32(obs, params)
    jax.block_until_ready((mu, std))
    mu_ref, std_ref = _reference_forward(obs, params)
    assert mu.shape == (BATCH, ACTION_DIM) and std.shape == (BATCH, ACTION_DIM)
    assert jnp.allclose(mu, mu_ref, atol=1e-5, rtol=1e-5)
    assert jnp.allclose(std, std_ref, atol=1e-5, rtol=1e-5)

    # 2) Batch spanning multiple grid steps (exercises padding + parallel grid).
    obs2 = jax.random.normal(k_obs2, (200, OBS_DIM), jnp.float32)
    mu2, std2 = fwd_f32(obs2, params)
    jax.block_until_ready((mu2, std2))
    mu2_ref, std2_ref = _reference_forward(obs2, params)
    assert mu2.shape == (200, ACTION_DIM) and std2.shape == (200, ACTION_DIM)
    assert jnp.allclose(mu2, mu2_ref, atol=1e-5, rtol=1e-5)
    assert jnp.allclose(std2, std2_ref, atol=1e-5, rtol=1e-5)

    # 3) bf16 matmul operands (the v6e/v7x fast path); epilogue stays f32.
    mu3, std3 = fwd_bf16(obs, params)
    jax.block_until_ready((mu3, std3))
    assert mu3.shape == (BATCH, ACTION_DIM) and std3.shape == (BATCH, ACTION_DIM)
    assert bool(jnp.all(jnp.isfinite(mu3))) and bool(jnp.all(jnp.isfinite(std3)))
    assert jnp.allclose(mu3, mu_ref, atol=0.2, rtol=0.2)
    assert jnp.allclose(std3, std_ref, atol=0.2, rtol=0.2)

    print("KERNEL_OK")
</pallas_src>

<mosaic_0001>
module attributes {stable_mosaic.version = 11 : i64} {
  func.func @_actor_kernel(%arg0: i32, %arg1: memref<128x32xf32, #tpu.memory_space<vmem>>, %arg2: memref<32x64xf32, #tpu.memory_space<vmem>>, %arg3: memref<1x64xf32, #tpu.memory_space<vmem>>, %arg4: memref<64x64xf32, #tpu.memory_space<vmem>>, %arg5: memref<1x64xf32, #tpu.memory_space<vmem>>, %arg6: memref<64x128xf32, #tpu.memory_space<vmem>>, %arg7: memref<1x128xf32, #tpu.memory_space<vmem>>, %arg8: memref<128x128xf32, #tpu.memory_space<vmem>>) attributes {dimension_semantics = [#tpu.dimension_semantics<parallel>], iteration_bounds = array<i64: 1>, scalar_prefetch = 0 : i64, scratch_operands = 0 : i64, tpu.core_type = #tpu.core_type<tc>, window_params = [{transform_indices = @transform_0, window_bounds = array<i64: 128, 32>}, {pipeline_mode = #tpu.pipeline_mode<synchronous>, transform_indices = @transform_1, window_bounds = array<i64: 32, 64>}, {pipeline_mode = #tpu.pipeline_mode<synchronous>, transform_indices = @transform_2, window_bounds = array<i64: 1, 64>}, {pipeline_mode = #tpu.pipeline_mode<synchronous>, transform_indices = @transform_3, window_bounds = array<i64: 64, 64>}, {pipeline_mode = #tpu.pipeline_mode<synchronous>, transform_indices = @transform_4, window_bounds = array<i64: 1, 64>}, {pipeline_mode = #tpu.pipeline_mode<synchronous>, transform_indices = @transform_5, window_bounds = array<i64: 64, 128>}, {pipeline_mode = #tpu.pipeline_mode<synchronous>, transform_indices = @transform_6, window_bounds = array<i64: 1, 128>}, {transform_indices = @transform_7, window_bounds = array<i64: 128, 128>}]} {
    %c0 = arith.constant 0 : index
    %c0_0 = arith.constant 0 : index
    %0 = vector.load %arg1[%c0, %c0_0] : memref<128x32xf32, #tpu.memory_space<vmem>>, vector<128x32xf32>
    %c0_1 = arith.constant 0 : index
    %c0_2 = arith.constant 0 : index
    %1 = vector.load %arg2[%c0_1, %c0_2] : memref<32x64xf32, #tpu.memory_space<vmem>>, vector<32x64xf32>
    %cst = arith.constant dense<0.000000e+00> : vector<128x64xf32>
    %2 = tpu.matmul %0, %1, %cst {dimension_numbers = #tpu.dot_dimension_numbers<[1], [0], [0], [1], [0, 0, 1, 1], [], []>} : vector<128x32xf32>, vector<32x64xf32>, vector<128x64xf32> -> vector<128x64xf32>
    %c0_3 = arith.constant 0 : index
    %c0_4 = arith.constant 0 : index
    %3 = vector.load %arg3[%c0_3, %c0_4] : memref<1x64xf32, #tpu.memory_space<vmem>>, vector<1x64xf32>
    %4 = vector.broadcast %3 : vector<1x64xf32> to vector<128x64xf32>
    %5 = arith.addf %2, %4 : vector<128x64xf32>
    %cst_5 = arith.constant 0.000000e+00 : f32
    %6 = vector.broadcast %cst_5 : f32 to vector<128x64xf32>
    %7 = arith.maximumf %5, %6 : vector<128x64xf32>
    %c0_6 = arith.constant 0 : index
    %c0_7 = arith.constant 0 : index
    %8 = vector.load %arg4[%c0_6, %c0_7] : memref<64x64xf32, #tpu.memory_space<vmem>>, vector<64x64xf32>
    %cst_8 = arith.constant dense<0.000000e+00> : vector<128x64xf32>
    %9 = tpu.matmul %7, %8, %cst_8 {dimension_numbers = #tpu.dot_dimension_numbers<[1], [0], [0], [1], [0, 0, 1, 1], [], []>} : vector<128x64xf32>, vector<64x64xf32>, vector<128x64xf32> -> vector<128x64xf32>
    %c0_9 = arith.constant 0 : index
    %c0_10 = arith.constant 0 : index
    %10 = vector.load %arg5[%c0_9, %c0_10] : memref<1x64xf32, #tpu.memory_space<vmem>>, vector<1x64xf32>
    %11 = vector.broadcast %10 : vector<1x64xf32> to vector<128x64xf32>
    %12 = arith.addf %9, %11 : vector<128x64xf32>
    %cst_11 = arith.constant 0.000000e+00 : f32
    %13 = vector.broadcast %cst_11 : f32 to vector<128x64xf32>
    %14 = arith.maximumf %12, %13 : vector<128x64xf32>
    %c0_12 = arith.constant 0 : index
    %c0_13 = arith.constant 0 : index
    %15 = vector.load %arg6[%c0_12, %c0_13] : memref<64x128xf32, #tpu.memory_space<vmem>>, vector<64x128xf32>
    %cst_14 = arith.constant dense<0.000000e+00> : vector<128x128xf32>
    %16 = tpu.matmul %14, %15, %cst_14 {dimension_numbers = #tpu.dot_dimension_numbers<[1], [0], [0], [1], [0, 0, 1, 1], [], []>} : vector<128x64xf32>, vector<64x128xf32>, vector<128x128xf32> -> vector<128x128xf32>
    %c0_15 = arith.constant 0 : index
    %c0_16 = arith.constant 0 : index
    %17 = vector.load %arg7[%c0_15, %c0_16] : memref<1x128xf32, #tpu.memory_space<vmem>>, vector<1x128xf32>
    %18 = vector.broadcast %17 : vector<1x128xf32> to vector<128x128xf32>
    %19 = arith.addf %16, %18 : vector<128x128xf32>
    %20 = tpu.iota {dimensions = array<i32: 1>} : vector<128x128xi32>
    %c6_i32 = arith.constant 6 : i32
    %21 = vector.broadcast %c6_i32 : i32 to vector<128x128xi32>
    %22 = arith.cmpi sge, %20, %21 : vector<128x128xi32>
    %c12_i32 = arith.constant 12 : i32
    %23 = vector.broadcast %c12_i32 : i32 to vector<128x128xi32>
    %24 = arith.cmpi slt, %20, %23 : vector<128x128xi32>
    %25 = arith.andi %22, %24 : vector<128x128xi1>
    %26 = math.tanh %19 : vector<128x128xf32>
    %cst_17 = arith.constant 1.000000e+00 : f32
    %27 = vector.broadcast %cst_17 : f32 to vector<128x128xf32>
    %28 = arith.addf %26, %27 : vector<128x128xf32>
    %cst_18 = arith.constant 3.500000e+00 : f32
    %29 = vector.broadcast %cst_18 : f32 to vector<128x128xf32>
    %30 = arith.mulf %29, %28 : vector<128x128xf32>
    %cst_19 = arith.constant -5.000000e+00 : f32
    %31 = vector.broadcast %cst_19 : f32 to vector<128x128xf32>
    %32 = arith.addf %31, %30 : vector<128x128xf32>
    %33 = math.exp %32 : vector<128x128xf32>
    %34 = arith.select %25, %33, %19 : vector<128x128xi1>, vector<128x128xf32>
    %c0_20 = arith.constant 0 : index
    %c0_21 = arith.constant 0 : index
    %35 = vector.load %arg8[%c0_20, %c0_21] : memref<128x128xf32, #tpu.memory_space<vmem>>, vector<128x128xf32>
    tpu.vector_store %arg8[%c0_20, %c0_21], %34 {strides = array<i32>} : memref<128x128xf32, #tpu.memory_space<vmem>>, vector<128x128xf32>,
    return
  }
  func.func @transform_0(%arg0: i32) -> (i32, i32) {
    %c0_i32 = arith.constant 0 : i32
    %c0_i32_0 = arith.constant 0 : i32
    return %arg0, %c0_i32 : i32, i32
  }
  func.func @transform_1(%arg0: i32) -> (i32, i32) {
    %c0_i32 = arith.constant 0 : i32
    %c0_i32_0 = arith.constant 0 : i32
    %c0_i32_1 = arith.constant 0 : i32
    return %c0_i32, %c0_i32_0 : i32, i32
  }
  func.func @transform_2(%arg0: i32) -> (i32, i32) {
    %c0_i32 = arith.constant 0 : i32
    %c0_i32_0 = arith.constant 0 : i32
    %c0_i32_1 = arith.constant 0 : i32
    return %c0_i32, %c0_i32_0 : i32, i32
  }
  func.func @transform_3(%arg0: i32) -> (i32, i32) {
    %c0_i32 = arith.constant 0 : i32
    %c0_i32_0 = arith.constant 0 : i32
    %c0_i32_1 = arith.constant 0 : i32
    return %c0_i32, %c0_i32_0 : i32, i32
  }
  func.func @transform_4(%arg0: i32) -> (i32, i32) {
    %c0_i32 = arith.constant 0 : i32
    %c0_i32_0 = arith.constant 0 : i32
    %c0_i32_1 = arith.constant 0 : i32
    return %c0_i32, %c0_i32_0 : i32, i32
  }
  func.func @transform_5(%arg0: i32) -> (i32, i32) {
    %c0_i32 = arith.constant 0 : i32
    %c0_i32_0 = arith.constant 0 : i32
    %c0_i32_1 = arith.constant 0 : i32
    return %c0_i32, %c0_i32_0 : i32, i32
  }
  func.func @transform_6(%arg0: i32) -> (i32, i32) {
    %c0_i32 = arith.constant 0 : i32
    %c0_i32_0 = arith.constant 0 : i32
    %c0_i32_1 = arith.constant 0 : i32
    return %c0_i32, %c0_i32_0 : i32, i32
  }
  func.func @transform_7(%arg0: i32) -> (i32, i32) {
    %c0_i32 = arith.constant 0 : i32
    %c0_i32_0 = arith.constant 0 : i32
    return %arg0, %c0_i32 : i32, i32
  }
}

</mosaic_0001>

<llo_original>
// kernel: diag_gaussian_actor_forward.1
$region0: #{diag_gaussian_actor_forward.1}
  #allocation0 [shape = 'u32[]', space=smem, size = 0x4, offset = 0x4, fixed_abs, tag = 'smem constant byte address 0x4 - core index']
  #allocation1 [shape = 'u32[144,128]{1,0:T(1,128)}', space=vmem, size = 0x12000, scoped, tag = 'internal scratch']
  %s0 = inlined_call_operand.vmem [shape: f32[128,32], index: 0, kind: input, shape index: {}]
  %s1 = inlined_call_operand.vmem [shape: f32[32,64], index: 1, kind: input, shape index: {}]
  %s2 = inlined_call_operand.vmem [shape: f32[1,64], index: 2, kind: input, shape index: {}]
  %s3 = inlined_call_operand.vmem [shape: f32[64,64], index: 3, kind: input, shape index: {}]
  %s4 = inlined_call_operand.vmem [shape: f32[1,64], index: 4, kind: input, shape index: {}]
  %s5 = inlined_call_operand.vmem [shape: f32[64,128], index: 5, kind: input, shape index: {}]
  %s6 = inlined_call_operand.vmem [shape: f32[1,128], index: 6, kind: input, shape index: {}]
  %s7 = inlined_call_operand.vmem [shape: f32[128,128], index: 7, kind: output, shape index: {}]
  %s8 = sld [smem:[#allocation0]]
  $region38: #{diag_gaussian_actor_forward.1} parent=0
    _
  %s10 = ssub.s32 1, %s8
  %s11 = scalar_select 0, %s10, %s8
  // Predicated region
  $region2: #{diag_gaussian_actor_forward.1} parent=0 // pred_check
    _
  $region3: #{diag_gaussian_actor_forward.1} parent=0 // pred_check_branch
    %13 = sbr.rel (0) target = $region5
  $region4: #{diag_gaussian_actor_forward.1} parent=0 // pred_region
    _
  $region5: #{diag_gaussian_actor_forward.1} parent=0 // pred_fallthru
    _
  // Predicated region
  $region6: #{diag_gaussian_actor_forward.1} parent=0 // pred_check
    _
  $region7: #{diag_gaussian_actor_forward.1} parent=0 // pred_check_branch
    %15 = sbr.rel (0) target = $region9
  $region8: #{diag_gaussian_actor_forward.1} parent=0 // pred_region
    _
  $region9: #{diag_gaussian_actor_forward.1} parent=0 // pred_fallthru
    _
  // Predicated region
  $region10: #{diag_gaussian_actor_forward.1} parent=0 // pred_check
    _
  $region11: #{diag_gaussian_actor_forward.1} parent=0 // pred_check_branch
    %17 = sbr.rel (0) target = $region13
  $region12: #{diag_gaussian_actor_forward.1} parent=0 // pred_region
    _
  $region13: #{diag_gaussian_actor_forward.1} parent=0 // pred_fallthru
    _
  // Predicated region
  $region14: #{diag_gaussian_actor_forward.1} parent=0 // pred_check
    _
  $region15: #{diag_gaussian_actor_forward.1} parent=0 // pred_check_branch
    %19 = sbr.rel (0) target = $region17
  $region16: #{diag_gaussian_actor_forward.1} parent=0 // pred_region
    _
  $region17: #{diag_gaussian_actor_forward.1} parent=0 // pred_fallthru
    _
  // Predicated region
  $region18: #{diag_gaussian_actor_forward.1} parent=0 // pred_check
    _
  $region19: #{diag_gaussian_actor_forward.1} parent=0 // pred_check_branch
    %21 = sbr.rel (0) target = $region21
  $region20: #{diag_gaussian_actor_forward.1} parent=0 // pred_region
    _
  $region21: #{diag_gaussian_actor_forward.1} parent=0 // pred_fallthru
    _
  // Predicated region
  $region22: #{diag_gaussian_actor_forward.1} parent=0 // pred_check
    _
  $region23: #{diag_gaussian_actor_forward.1} parent=0 // pred_check_branch
    %23 = sbr.rel (0) target = $region25
  $region24: #{diag_gaussian_actor_forward.1} parent=0 // pred_region
    _
  $region25: #{diag_gaussian_actor_forward.1} parent=0 // pred_fallthru
    _
  // Predicated region
  $region26: #{diag_gaussian_actor_forward.1} parent=0 // pred_check
    _
  $region27: #{diag_gaussian_actor_forward.1} parent=0 // pred_check_branch
    %25 = sbr.rel (0) target = $region29
  $region28: #{diag_gaussian_actor_forward.1} parent=0 // pred_region
    _
  $region29: #{diag_gaussian_actor_forward.1} parent=0 // pred_fallthru
    _
  %v26 = vld [vmem:[%s0] sm:$0xff]
  %v27 = vld [vmem:[%s0 + $0x8] sm:$0xff]
  %v28 = vld [vmem:[%s0 + $0x10] sm:$0xff]
  %v29 = vld [vmem:[%s0 + $0x18] sm:$0xff]
  %v30 = vld [vmem:[%s0 + $0x20] sm:$0xff]
  %v31 = vld [vmem:[%s0 + $0x28] sm:$0xff]
  %v32 = vld [vmem:[%s0 + $0x30] sm:$0xff]
  %v33 = vld [vmem:[%s0 + $0x38] sm:$0xff]
  %v34 = vld [vmem:[%s0 + $0x40] sm:$0xff]
  %v35 = vld [vmem:[%s0 + $0x48] sm:$0xff]
  %v36 = vld [vmem:[%s0 + $0x50] sm:$0xff]
  %v37 = vld [vmem:[%s0 + $0x58] sm:$0xff]
  %v38 = vld [vmem:[%s0 + $0x60] sm:$0xff]
  %v39 = vld [vmem:[%s0 + $0x68] sm:$0xff]
  %v40 = vld [vmem:[%s0 + $0x70] sm:$0xff]
  %v41 = vld [vmem:[%s0 + $0x78] sm:$0xff]
  %v42 = vld [vmem:[%s1] sm:$0xff]
  %v43 = vld [vmem:[%s1 + $0x8] sm:$0xff]
  %v44 = vld [vmem:[%s1 + $0x10] sm:$0xff]
  %v45 = vld [vmem:[%s1 + $0x18] sm:$0xff]
  %v46 = vld [vmem:[%s2] sm:$0x1]
  %v48 = vlaneseq
  %v49 = vshrl.u32 %v48, 7
  %v50 = vsub.s32 0, %v49
  %v51 = vrot.slane %v46, %v50
  %vm53 = vcmask 261120
  %v55 = vsel %vm53, %v26, 0
  %v58 = vsel %vm53, %v27, 0
  %v61 = vsel %vm53, %v28, 0
  %v64 = vsel %vm53, %v29, 0
  %v67 = vsel %vm53, %v30, 0
  %v70 = vsel %vm53, %v31, 0
  %v73 = vsel %vm53, %v32, 0
  %v76 = vsel %vm53, %v33, 0
  %v79 = vsel %vm53, %v34, 0
  %v82 = vsel %vm53, %v35, 0
  %v85 = vsel %vm53, %v36, 0
  %v88 = vsel %vm53, %v37, 0
  %v91 = vsel %vm53, %v38, 0
  %v94 = vsel %vm53, %v39, 0
  %v97 = vsel %vm53, %v40, 0
  %v100 = vsel %vm53, %v41, 0
  %102 = vmatprep.subr.mxu0 0.0
  %103 = vmatpush1.msra.mxu0 0.0
  %104 = vmatprep.subr.mxu0 0.0
  %105 = vmatpush1.msra.mxu0 0.0
  %106 = vmatprep.subr.mxu0 0.0
  %107 = vmatpush1.msra.mxu0 0.0
  %108 = vmatprep.subr.mxu0 0.0
  %109 = vmatpush1.msra.mxu0 0.0
  %110 = vmatprep.subr.mxu0 0.0
  %111 = vmatpush1.msra.mxu0 0.0
  %112 = vmatprep.subr.mxu0 0.0
  %113 = vmatpush1.msra.mxu0 0.0
  %114 = vmatprep.subr.mxu0 0.0
  %115 = vmatpush1.msra.mxu0 0.0
  %116 = vmatprep.subr.mxu0 0.0
  %117 = vmatpush1.msra.mxu0 0.0
  %118 = vmatprep.subr.mxu0 0.0
  %119 = vmatpush1.msra.mxu0 0.0
  %120 = vmatprep.subr.mxu0 0.0
  %121 = vmatpush1.msra.mxu0 0.0
  %122 = vmatprep.subr.mxu0 0.0
  %123 = vmatpush1.msra.mxu0 0.0
  %124 = vmatprep.subr.mxu0 0.0
  %125 = vmatpush1.msra.mxu0 0.0
  %126 = vmatprep.subr.mxu0 0.0
  %127 = vmatpush1.msra.mxu0 %v45
  %128 = vmatprep.subr.mxu0 0.0
  %129 = vmatpush1.msra.mxu0 %v44
  %130 = vmatprep.subr.mxu0 0.0
  %131 = vmatpush1.msra.mxu0 %v43
  %132 = vmatprep.subr.mxu0 0.0
  %133 = vmatpush1.msra.mxu0 %v42
  %134 = vmatprep.subr.mxu0 0.0
  %135 = vmatpush2.msra.mxu0 0.0
  %136 = vmatprep.subr.mxu0 0.0
  %137 = vmatpush2.msra.mxu0 0.0
  %138 = vmatprep.subr.mxu0 0.0
  %139 = vmatpush2.msra.mxu0 0.0
  %140 = vmatprep.subr.mxu0 0.0
  %141 = vmatpush2.msra.mxu0 0.0
  %142 = vmatprep.subr.mxu0 0.0
  %143 = vmatpush2.msra.mxu0 0.0
  %144 = vmatprep.subr.mxu0 0.0
  %145 = vmatpush2.msra.mxu0 0.0
  %146 = vmatprep.subr.mxu0 0.0
  %147 = vmatpush2.msra.mxu0 0.0
  %148 = vmatprep.subr.mxu0 0.0
  %149 = vmatpush2.msra.mxu0 0.0
  %150 = vmatprep.subr.mxu0 0.0
  %151 = vmatpush2.msra.mxu0 0.0
  %152 = vmatprep.subr.mxu0 0.0
  %153 = vmatpush2.msra.mxu0 0.0
  %154 = vmatprep.subr.mxu0 0.0
  %155 = vmatpush2.msra.mxu0 0.0
  %156 = vmatprep.subr.mxu0 0.0
  %157 = vmatpush2.msra.mxu0 0.0
  %158 = vmatprep.subr.mxu0 0.0
  %159 = vmatpush2.msra.mxu0 0.0
  %160 = vmatprep.subr.mxu0 0.0
  %161 = vmatpush2.msra.mxu0 0.0
  %162 = vmatprep.subr.mxu0 0.0
  %163 = vmatpush2.msra.mxu0 0.0
  %164 = vmatprep.subr.mxu0 0.0
  %165 = vmatpush2.msra.mxu0 0.0
  %166 = vmatprep.mubr.f32.mxu0 0.0
  %167 = vmatmul.mubr.f32.gmra.mxu0 %v55
  %v168 = vpop.f32.mrf.mxu0
  %v169 = vadd.f32 %v51, %v168
  %v170 = vpop.f32.mrf.mxu0
  %171 = vmatprep.mubr.f32.mxu0 0.0
  %172 = vmatmul.mubr.f32.gmra.mxu0 %v58
  %v173 = vpop.f32.mrf.mxu0
  %v174 = vadd.f32 %v51, %v173
  %v175 = vpop.f32.mrf.mxu0
  %176 = vmatprep.mubr.f32.mxu0 0.0
  %177 = vmatmul.mubr.f32.gmra.mxu0 %v61
  %v178 = vpop.f32.mrf.mxu0
  %v179 = vadd.f32 %v51, %v178
  %v180 = vpop.f32.mrf.mxu0
  %181 = vmatprep.mubr.f32.mxu0 0.0
  %182 = vmatmul.mubr.f32.gmra.mxu0 %v64
  %v183 = vpop.f32.mrf.mxu0
  %v184 = vadd.f32 %v51, %v183
  %v185 = vpop.f32.mrf.mxu0
  %186 = vmatprep.mubr.f32.mxu0 0.0
  %187 = vmatmul.mubr.f32.gmra.mxu0 %v67
  %v188 = vpop.f32.mrf.mxu0
  %v189 = vadd.f32 %v51, %v188
  %v190 = vpop.f32.mrf.mxu0
  %191 = vmatprep.mubr.f32.mxu0 0.0
  %192 = vmatmul.mubr.f32.gmra.mxu0 %v70
  %v193 = vpop.f32.mrf.mxu0
  %v194 = vadd.f32 %v51, %v193
  %v195 = vpop.f32.mrf.mxu0
  %196 = vmatprep.mubr.f32.mxu0 0.0
  %197 = vmatmul.mubr.f32.gmra.mxu0 %v73
  %v198 = vpop.f32.mrf.mxu0
  %v199 = vadd.f32 %v51, %v198
  %v200 = vpop.f32.mrf.mxu0
  %201 = vmatprep.mubr.f32.mxu0 0.0
  %202 = vmatmul.mubr.f32.gmra.mxu0 %v76
  %v203 = vpop.f32.mrf.mxu0
  %v204 = vadd.f32 %v51, %v203
  %v205 = vpop.f32.mrf.mxu0
  %206 = vmatprep.mubr.f32.mxu0 0.0
  %207 = vmatmul.mubr.f32.gmra.mxu0 %v79
  %v208 = vpop.f32.mrf.mxu0
  %v209 = vadd.f32 %v51, %v208
  %v210 = vpop.f32.mrf.mxu0
  %211 = vmatprep.mubr.f32.mxu0 0.0
  %212 = vmatmul.mubr.f32.gmra.mxu0 %v82
  %v213 = vpop.f32.mrf.mxu0
  %v214 = vadd.f32 %v51, %v213
  %v215 = vpop.f32.mrf.mxu0
  %216 = vmatprep.mubr.f32.mxu0 0.0
  %217 = vmatmul.mubr.f32.gmra.mxu0 %v85
  %v218 = vpop.f32.mrf.mxu0
  %v219 = vadd.f32 %v51, %v218
  %v220 = vpop.f32.mrf.mxu0
  %221 = vmatprep.mubr.f32.mxu0 0.0
  %222 = vmatmul.mubr.f32.gmra.mxu0 %v88
  %v223 = vpop.f32.mrf.mxu0
  %v224 = vadd.f32 %v51, %v223
  %v225 = vpop.f32.mrf.mxu0
  %226 = vmatprep.mubr.f32.mxu0 0.0
  %227 = vmatmul.mubr.f32.gmra.mxu0 %v91
  %v228 = vpop.f32.mrf.mxu0
  %v229 = vadd.f32 %v51, %v228
  %v230 = vpop.f32.mrf.mxu0
  %231 = vmatprep.mubr.f32.mxu0 0.0
  %232 = vmatmul.mubr.f32.gmra.mxu0 %v94
  %v233 = vpop.f32.mrf.mxu0
  %v234 = vadd.f32 %v51, %v233
  %v235 = vpop.f32.mrf.mxu0
  %236 = vmatprep.mubr.f32.mxu0 0.0
  %237 = vmatmul.mubr.f32.gmra.mxu0 %v97
  %v238 = vpop.f32.mrf.mxu0
  %v239 = vadd.f32 %v51, %v238
  %v240 = vpop.f32.mrf.mxu0
  %241 = vmatprep.mubr.f32.mxu0 0.0
  %242 = vmatmul.mubr.f32.gmra.mxu0 %v100
  %v243 = vpop.f32.mrf.mxu0
  %v244 = vadd.f32 %v51, %v243
  %v245 = vpop.f32.mrf.mxu0
  %246 = vdwg.mxu0
  %v247 = vmax.f32 %v169, 0.0
  %v248 = vmax.f32 %v174, 0.0
  %v249 = vmax.f32 %v179, 0.0
  %v250 = vmax.f32 %v184, 0.0
  %v251 = vmax.f32 %v189, 0.0
  %v252 = vmax.f32 %v194, 0.0
  %v253 = vmax.f32 %v199, 0.0
  %v254 = vmax.f32 %v204, 0.0
  %v255 = vmax.f32 %v209, 0.0
  %v256 = vmax.f32 %v214, 0.0
  %v257 = vmax.f32 %v219, 0.0
  %v258 = vmax.f32 %v224, 0.0
  %v259 = vmax.f32 %v229, 0.0
  %v260 = vmax.f32 %v234, 0.0
  %v261 = vmax.f32 %v239, 0.0
  %v262 = vmax.f32 %v244, 0.0
  %v263 = vld [vmem:[%s3] sm:$0xff]
  %v264 = vld [vmem:[%s3 + $0x8] sm:$0xff]
  %v265 = vld [vmem:[%s3 + $0x10] sm:$0xff]
  %v266 = vld [vmem:[%s3 + $0x18] sm:$0xff]
  %v267 = vld [vmem:[%s3 + $0x20] sm:$0xff]
  %v268 = vld [vmem:[%s3 + $0x28] sm:$0xff]
  %v269 = vld [vmem:[%s3 + $0x30] sm:$0xff]
  %v270 = vld [vmem:[%s3 + $0x38] sm:$0xff]
  %v271 = vld [vmem:[%s4] sm:$0x1]
  %v273 = vlaneseq
  %v274 = vshrl.u32 %v273, 7
  %v275 = vsub.s32 0, %v274
  %v276 = vrot.slane %v271, %v275
  %vm278 = vcmask 523264
  %v280 = vsel %vm278, %v247, 0
  %v283 = vsel %vm278, %v248, 0
  %v286 = vsel %vm278, %v249, 0
  %v289 = vsel %vm278, %v250, 0
  %v292 = vsel %vm278, %v251, 0
  %v295 = vsel %vm278, %v252, 0
  %v298 = vsel %vm278, %v253, 0
  %v301 = vsel %vm278, %v254, 0
  %v304 = vsel %vm278, %v255, 0
  %v307 = vsel %vm278, %v256, 0
  %v310 = vsel %vm278, %v257, 0
  %v313 = vsel %vm278, %v258, 0
  %v316 = vsel %vm278, %v259, 0
  %v319 = vsel %vm278, %v260, 0
  %v322 = vsel %vm278, %v261, 0
  %v325 = vsel %vm278, %v262, 0
  %327 = vmatprep.subr.mxu0 0.0
  %328 = vmatpush1.msra.mxu0 0.0
  %329 = vmatprep.subr.mxu0 0.0
  %330 = vmatpush1.msra.mxu0 0.0
  %331 = vmatprep.subr.mxu0 0.0
  %332 = vmatpush1.msra.mxu0 0.0
  %333 = vmatprep.subr.mxu0 0.0
  %334 = vmatpush1.msra.mxu0 0.0
  %335 = vmatprep.subr.mxu0 0.0
  %336 = vmatpush1.msra.mxu0 0.0
  %337 = vmatprep.subr.mxu0 0.0
  %338 = vmatpush1.msra.mxu0 0.0
  %339 = vmatprep.subr.mxu0 0.0
  %340 = vmatpush1.msra.mxu0 0.0
  %341 = vmatprep.subr.mxu0 0.0
  %342 = vmatpush1.msra.mxu0 0.0
  %343 = vmatprep.subr.mxu0 0.0
  %344 = vmatpush1.msra.mxu0 %v270
  %345 = vmatprep.subr.mxu0 0.0
  %346 = vmatpush1.msra.mxu0 %v269
  %347 = vmatprep.subr.mxu0 0.0
  %348 = vmatpush1.msra.mxu0 %v268
  %349 = vmatprep.subr.mxu0 0.0
  %350 = vmatpush1.msra.mxu0 %v267
  %351 = vmatprep.subr.mxu0 0.0
  %352 = vmatpush1.msra.mxu0 %v266
  %353 = vmatprep.subr.mxu0 0.0
  %354 = vmatpush1.msra.mxu0 %v265
  %355 = vmatprep.subr.mxu0 0.0
  %356 = vmatpush1.msra.mxu0 %v264
  %357 = vmatprep.subr.mxu0 0.0
  %358 = vmatpush1.msra.mxu0 %v263
  %359 = vmatprep.subr.mxu0 0.0
  %360 = vmatpush2.msra.mxu0 0.0
  %361 = vmatprep.subr.mxu0 0.0
  %362 = vmatpush2.msra.mxu0 0.0
  %363 = vmatprep.subr.mxu0 0.0
  %364 = vmatpush2.msra.mxu0 0.0
  %365 = vmatprep.subr.mxu0 0.0
  %366 = vmatpush2.msra.mxu0 0.0
  %367 = vmatprep.subr.mxu0 0.0
  %368 = vmatpush2.msra.mxu0 0.0
  %369 = vmatprep.subr.mxu0 0.0
  %370 = vmatpush2.msra.mxu0 0.0
  %371 = vmatprep.subr.mxu0 0.0
  %372 = vmatpush2.msra.mxu0 0.0
  %373 = vmatprep.subr.mxu0 0.0
  %374 = vmatpush2.msra.mxu0 0.0
  %375 = vmatprep.subr.mxu0 0.0
  %376 = vmatpush2.msra.mxu0 0.0
  %377 = vmatprep.subr.mxu0 0.0
  %378 = vmatpush2.msra.mxu0 0.0
  %379 = vmatprep.subr.mxu0 0.0
  %380 = vmatpush2.msra.mxu0 0.0
  %381 = vmatprep.subr.mxu0 0.0
  %382 = vmatpush2.msra.mxu0 0.0
  %383 = vmatprep.subr.mxu0 0.0
  %384 = vmatpush2.msra.mxu0 0.0
  %385 = vmatprep.subr.mxu0 0.0
  %386 = vmatpush2.msra.mxu0 0.0
  %387 = vmatprep.subr.mxu0 0.0
  %388 = vmatpush2.msra.mxu0 0.0
  %389 = vmatprep.subr.mxu0 0.0
  %390 = vmatpush2.msra.mxu0 0.0
  %391 = vmatprep.mubr.f32.mxu0 0.0
  %392 = vmatmul.mubr.f32.gmra.mxu0 %v280
  %v393 = vpop.f32.mrf.mxu0
  %v394 = vadd.f32 %v276, %v393
  %v395 = vpop.f32.mrf.mxu0
  %396 = vmatprep.mubr.f32.mxu0 0.0
  %397 = vmatmul.mubr.f32.gmra.mxu0 %v283
  %v398 = vpop.f32.mrf.mxu0
  %v399 = vadd.f32 %v276, %v398
  %v400 = vpop.f32.mrf.mxu0
  %401 = vmatprep.mubr.f32.mxu0 0.0
  %402 = vmatmul.mubr.f32.gmra.mxu0 %v286
  %v403 = vpop.f32.mrf.mxu0
  %v404 = vadd.f32 %v276, %v403
  %v405 = vpop.f32.mrf.mxu0
  %406 = vmatprep.mubr.f32.mxu0 0.0
  %407 = vmatmul.mubr.f32.gmra.mxu0 %v289
  %v408 = vpop.f32.mrf.mxu0
  %v409 = vadd.f32 %v276, %v408
  %v410 = vpop.f32.mrf.mxu0
  %411 = vmatprep.mubr.f32.mxu0 0.0
  %412 = vmatmul.mubr.f32.gmra.mxu0 %v292
  %v413 = vpop.f32.mrf.mxu0
  %v414 = vadd.f32 %v276, %v413
  %v415 = vpop.f32.mrf.mxu0
  %416 = vmatprep.mubr.f32.mxu0 0.0
  %417 = vmatmul.mubr.f32.gmra.mxu0 %v295
  %v418 = vpop.f32.mrf.mxu0
  %v419 = vadd.f32 %v276, %v418
  %v420 = vpop.f32.mrf.mxu0
  %421 = vmatprep.mubr.f32.mxu0 0.0
  %422 = vmatmul.mubr.f32.gmra.mxu0 %v298
  %v423 = vpop.f32.mrf.mxu0
  %v424 = vadd.f32 %v276, %v423
  %v425 = vpop.f32.mrf.mxu0
  %426 = vmatprep.mubr.f32.mxu0 0.0
  %427 = vmatmul.mubr.f32.gmra.mxu0 %v301
  %v428 = vpop.f32.mrf.mxu0
  %v429 = vadd.f32 %v276, %v428
  %v430 = vpop.f32.mrf.mxu0
  %431 = vmatprep.mubr.f32.mxu0 0.0
  %432 = vmatmul.mubr.f32.gmra.mxu0 %v304
  %v433 = vpop.f32.mrf.mxu0
  %v434 = vadd.f32 %v276, %v433
  %v435 = vpop.f32.mrf.mxu0
  %436 = vmatprep.mubr.f32.mxu0 0.0
  %437 = vmatmul.mubr.f32.gmra.mxu0 %v307
  %v438 = vpop.f32.mrf.mxu0
  %v439 = vadd.f32 %v276, %v438
  %v440 = vpop.f32.mrf.mxu0
  %441 = vmatprep.mubr.f32.mxu0 0.0
  %442 = vmatmul.mubr.f32.gmra.mxu0 %v310
  %v443 = vpop.f32.mrf.mxu0
  %v444 = vadd.f32 %v276, %v443
  %v445 = vpop.f32.mrf.mxu0
  %446 = vmatprep.mubr.f32.mxu0 0.0
  %447 = vmatmul.mubr.f32.gmra.mxu0 %v313
  %v448 = vpop.f32.mrf.mxu0
  %v449 = vadd.f32 %v276, %v448
  %v450 = vpop.f32.mrf.mxu0
  %451 = vmatprep.mubr.f32.mxu0 0.0
  %452 = vmatmul.mubr.f32.gmra.mxu0 %v316
  %v453 = vpop.f32.mrf.mxu0
  %v454 = vadd.f32 %v276, %v453
  %v455 = vpop.f32.mrf.mxu0
  %456 = vmatprep.mubr.f32.mxu0 0.0
  %457 = vmatmul.mubr.f32.gmra.mxu0 %v319
  %v458 = vpop.f32.mrf.mxu0
  %v459 = vadd.f32 %v276, %v458
  %v460 = vpop.f32.mrf.mxu0
  %461 = vmatprep.mubr.f32.mxu0 0.0
  %462 = vmatmul.mubr.f32.gmra.mxu0 %v322
  %v463 = vpop.f32.mrf.mxu0
  %v464 = vadd.f32 %v276, %v463
  %v465 = vpop.f32.mrf.mxu0
  %466 = vmatprep.mubr.f32.mxu0 0.0
  %467 = vmatmul.mubr.f32.gmra.mxu0 %v325
  %v468 = vpop.f32.mrf.mxu0
  %v469 = vadd.f32 %v276, %v468
  %v470 = vpop.f32.mrf.mxu0
  %471 = vdwg.mxu0
  %v472 = vmax.f32 %v394, 0.0
  %v473 = vmax.f32 %v399, 0.0
  %v474 = vmax.f32 %v404, 0.0
  %v475 = vmax.f32 %v409, 0.0
  %v476 = vmax.f32 %v414, 0.0
  %v477 = vmax.f32 %v419, 0.0
  %v478 = vmax.f32 %v424, 0.0
  %v479 = vmax.f32 %v429, 0.0
  %v480 = vmax.f32 %v434, 0.0
  %v481 = vmax.f32 %v439, 0.0
  %v482 = vmax.f32 %v444, 0.0
  %v483 = vmax.f32 %v449, 0.0
  %v484 = vmax.f32 %v454, 0.0
  %v485 = vmax.f32 %v459, 0.0
  %v486 = vmax.f32 %v464, 0.0
  %v487 = vmax.f32 %v469, 0.0
  %v488 = vld [vmem:[%s5] sm:$0xff]
  %v489 = vld [vmem:[%s5 + $0x8] sm:$0xff]
  %v490 = vld [vmem:[%s5 + $0x10] sm:$0xff]
  %v491 = vld [vmem:[%s5 + $0x18] sm:$0xff]
  %v492 = vld [vmem:[%s5 + $0x20] sm:$0xff]
  %v493 = vld [vmem:[%s5 + $0x28] sm:$0xff]
  %v494 = vld [vmem:[%s5 + $0x30] sm:$0xff]
  %v495 = vld [vmem:[%s5 + $0x38] sm:$0xff]
  %v496 = vld [vmem:[%s6] sm:$0x1]
  %v498 = vlaneseq
  %v499 = vshrl.u32 %v498, 7
  %v500 = vsub.s32 0, %v499
  %v501 = vrot.slane %v496, %v500
  %v504 = vsel %vm278, %v472, 0
  %v507 = vsel %vm278, %v473, 0
  %v510 = vsel %vm278, %v474, 0
  %v513 = vsel %vm278, %v475, 0
  %v516 = vsel %vm278, %v476, 0
  %v519 = vsel %vm278, %v477, 0
  %v522 = vsel %vm278, %v478, 0
  %v525 = vsel %vm278, %v479, 0
  %v528 = vsel %vm278, %v480, 0
  %v531 = vsel %vm278, %v481, 0
  %v534 = vsel %vm278, %v482, 0
  %v537 = vsel %vm278, %v483, 0
  %v540 = vsel %vm278, %v484, 0
  %v543 = vsel %vm278, %v485, 0
  %v546 = vsel %vm278, %v486, 0
  %v549 = vsel %vm278, %v487, 0
  %551 = vmatprep.subr.mxu0 0.0
  %552 = vmatpush1.msra.mxu0 0.0
  %553 = vmatprep.subr.mxu0 0.0
  %554 = vmatpush1.msra.mxu0 0.0
  %555 = vmatprep.subr.mxu0 0.0
  %556 = vmatpush1.msra.mxu0 0.0
  %557 = vmatprep.subr.mxu0 0.0
  %558 = vmatpush1.msra.mxu0 0.0
  %559 = vmatprep.subr.mxu0 0.0
  %560 = vmatpush1.msra.mxu0 0.0
  %561 = vmatprep.subr.mxu0 0.0
  %562 = vmatpush1.msra.mxu0 0.0
  %563 = vmatprep.subr.mxu0 0.0
  %564 = vmatpush1.msra.mxu0 0.0
  %565 = vmatprep.subr.mxu0 0.0
  %566 = vmatpush1.msra.mxu0 0.0
  %567 = vmatprep.subr.mxu0 0.0
  %568 = vmatpush1.msra.mxu0 %v495
  %569 = vmatprep.subr.mxu0 0.0
  %570 = vmatpush1.msra.mxu0 %v494
  %571 = vmatprep.subr.mxu0 0.0
  %572 = vmatpush1.msra.mxu0 %v493
  %573 = vmatprep.subr.mxu0 0.0
  %574 = vmatpush1.msra.mxu0 %v492
  %575 = vmatprep.subr.mxu0 0.0
  %576 = vmatpush1.msra.mxu0 %v491
  %577 = vmatprep.subr.mxu0 0.0
  %578 = vmatpush1.msra.mxu0 %v490
  %579 = vmatprep.subr.mxu0 0.0
  %580 = vmatpush1.msra.mxu0 %v489
  %581 = vmatprep.subr.mxu0 0.0
  %582 = vmatpush1.msra.mxu0 %v488
  %583 = vmatprep.subr.mxu0 0.0
  %584 = vmatpush2.msra.mxu0 0.0
  %585 = vmatprep.subr.mxu0 0.0
  %586 = vmatpush2.msra.mxu0 0.0
  %587 = vmatprep.subr.mxu0 0.0
  %588 = vmatpush2.msra.mxu0 0.0
  %589 = vmatprep.subr.mxu0 0.0
  %590 = vmatpush2.msra.mxu0 0.0
  %591 = vmatprep.subr.mxu0 0.0
  %592 = vmatpush2.msra.mxu0 0.0
  %593 = vmatprep.subr.mxu0 0.0
  %594 = vmatpush2.msra.mxu0 0.0
  %595 = vmatprep.subr.mxu0 0.0
  %596 = vmatpush2.msra.mxu0 0.0
  %597 = vmatprep.subr.mxu0 0.0
  %598 = vmatpush2.msra.mxu0 0.0
  %599 = vmatprep.subr.mxu0 0.0
  %600 = vmatpush2.msra.mxu0 0.0
  %601 = vmatprep.subr.mxu0 0.0
  %602 = vmatpush2.msra.mxu0 0.0
  %603 = vmatprep.subr.mxu0 0.0
  %604 = vmatpush2.msra.mxu0 0.0
  %605 = vmatprep.subr.mxu0 0.0
  %606 = vmatpush2.msra.mxu0 0.0
  %607 = vmatprep.subr.mxu0 0.0
  %608 = vmatpush2.msra.mxu0 0.0
  %609 = vmatprep.subr.mxu0 0.0
  %610 = vmatpush2.msra.mxu0 0.0
  %611 = vmatprep.subr.mxu0 0.0
  %612 = vmatpush2.msra.mxu0 0.0
  %613 = vmatprep.subr.mxu0 0.0
  %614 = vmatpush2.msra.mxu0 0.0
  %615 = vmatprep.mubr.f32.mxu0 0.0
  %616 = vmatmul.mubr.f32.gmra.mxu0 %v504
  %v617 = vpop.f32.mrf.mxu0
  %v618 = vadd.f32 %v501, %v617
  %v619 = vpop.f32.mrf.mxu0
  %620 = vmatprep.mubr.f32.mxu0 0.0
  %621 = vmatmul.mubr.f32.gmra.mxu0 %v507
  %v622 = vpop.f32.mrf.mxu0
  %v623 = vadd.f32 %v501, %v622
  %v624 = vpop.f32.mrf.mxu0
  %625 = vmatprep.mubr.f32.mxu0 0.0
  %626 = vmatmul.mubr.f32.gmra.mxu0 %v510
  %v627 = vpop.f32.mrf.mxu0
  %v628 = vadd.f32 %v501, %v627
  %v629 = vpop.f32.mrf.mxu0
  %630 = vmatprep.mubr.f32.mxu0 0.0
  %631 = vmatmul.mubr.f32.gmra.mxu0 %v513
  %v632 = vpop.f32.mrf.mxu0
  %v633 = vadd.f32 %v501, %v632
  %v634 = vpop.f32.mrf.mxu0
  %635 = vmatprep.mubr.f32.mxu0 0.0
  %636 = vmatmul.mubr.f32.gmra.mxu0 %v516
  %v637 = vpop.f32.mrf.mxu0
  %v638 = vadd.f32 %v501, %v637
  %v639 = vpop.f32.mrf.mxu0
  %640 = vmatprep.mubr.f32.mxu0 0.0
  %641 = vmatmul.mubr.f32.gmra.mxu0 %v519
  %v642 = vpop.f32.mrf.mxu0
  %v643 = vadd.f32 %v501, %v642
  %v644 = vpop.f32.mrf.mxu0
  %645 = vmatprep.mubr.f32.mxu0 0.0
  %646 = vmatmul.mubr.f32.gmra.mxu0 %v522
  %v647 = vpop.f32.mrf.mxu0
  %v648 = vadd.f32 %v501, %v647
  %v649 = vpop.f32.mrf.mxu0
  %650 = vmatprep.mubr.f32.mxu0 0.0
  %651 = vmatmul.mubr.f32.gmra.mxu0 %v525
  %v652 = vpop.f32.mrf.mxu0
  %v653 = vadd.f32 %v501, %v652
  %v654 = vpop.f32.mrf.mxu0
  %655 = vmatprep.mubr.f32.mxu0 0.0
  %656 = vmatmul.mubr.f32.gmra.mxu0 %v528
  %v657 = vpop.f32.mrf.mxu0
  %v658 = vadd.f32 %v501, %v657
  %v659 = vpop.f32.mrf.mxu0
  %660 = vmatprep.mubr.f32.mxu0 0.0
  %661 = vmatmul.mubr.f32.gmra.mxu0 %v531
  %v662 = vpop.f32.mrf.mxu0
  %v663 = vadd.f32 %v501, %v662
  %v664 = vpop.f32.mrf.mxu0
  %665 = vmatprep.mubr.f32.mxu0 0.0
  %666 = vmatmul.mubr.f32.gmra.mxu0 %v534
  %v667 = vpop.f32.mrf.mxu0
  %v668 = vadd.f32 %v501, %v667
  %v669 = vpop.f32.mrf.mxu0
  %670 = vmatprep.mubr.f32.mxu0 0.0
  %671 = vmatmul.mubr.f32.gmra.mxu0 %v537
  %v672 = vpop.f32.mrf.mxu0
  %v673 = vadd.f32 %v501, %v672
  %v674 = vpop.f32.mrf.mxu0
  %675 = vmatprep.mubr.f32.mxu0 0.0
  %676 = vmatmul.mubr.f32.gmra.mxu0 %v540
  %v677 = vpop.f32.mrf.mxu0
  %v678 = vadd.f32 %v501, %v677
  %v679 = vpop.f32.mrf.mxu0
  %680 = vmatprep.mubr.f32.mxu0 0.0
  %681 = vmatmul.mubr.f32.gmra.mxu0 %v543
  %v682 = vpop.f32.mrf.mxu0
  %v683 = vadd.f32 %v501, %v682
  %v684 = vpop.f32.mrf.mxu0
  %685 = vmatprep.mubr.f32.mxu0 0.0
  %686 = vmatmul.mubr.f32.gmra.mxu0 %v546
  %v687 = vpop.f32.mrf.mxu0
  %v688 = vadd.f32 %v501, %v687
  %v689 = vpop.f32.mrf.mxu0
  %690 = vmatprep.mubr.f32.mxu0 0.0
  %691 = vmatmul.mubr.f32.gmra.mxu0 %v549
  %v692 = vpop.f32.mrf.mxu0
  %v693 = vadd.f32 %v501, %v692
  %v694 = vpop.f32.mrf.mxu0
  %695 = vdwg.mxu0
  %v696 = vlaneseq
  %v697 = vand.u32 %v696, 127
  %vm698 = vcmp.ge.s32.totalorder %v697, 6
  %vm699 = vcmp.lt.s32.totalorder %v697, 12
  %vm700 = vmand %vm698, %vm699
  %v701 = vtanh.pop %v618
  %v702 = vtanh.pop %v623
  %v703 = vtanh.pop %v628
  %v704 = vtanh.pop %v633
  %v705 = vtanh.pop %v638
  %v706 = vtanh.pop %v643
  %v707 = vtanh.pop %v648
  %v708 = vtanh.pop %v653
  %v709 = vtanh.pop %v658
  %v710 = vtanh.pop %v663
  %v711 = vtanh.pop %v668
  %v712 = vtanh.pop %v673
  %v713 = vtanh.pop %v678
  %v714 = vtanh.pop %v683
  %v715 = vtanh.pop %v688
  %v716 = vtanh.pop %v693
  %v717 = vadd.f32 %v701, 1.0
  %v718 = vadd.f32 %v702, 1.0
  %v719 = vadd.f32 %v703, 1.0
  %v720 = vadd.f32 %v704, 1.0
  %v721 = vadd.f32 %v705, 1.0
  %v722 = vadd.f32 %v706, 1.0
  %v723 = vadd.f32 %v707, 1.0
  %v724 = vadd.f32 %v708, 1.0
  %v725 = vadd.f32 %v709, 1.0
  %v726 = vadd.f32 %v710, 1.0
  %v727 = vadd.f32 %v711, 1.0
  %v728 = vadd.f32 %v712, 1.0
  %v729 = vadd.f32 %v713, 1.0
  %v730 = vadd.f32 %v714, 1.0
  %v731 = vadd.f32 %v715, 1.0
  %v732 = vadd.f32 %v716, 1.0
  %v733 = vmul.f32 %v717, 3.5
  %v734 = vmul.f32 %v718, 3.5
  %v735 = vmul.f32 %v719, 3.5
  %v736 = vmul.f32 %v720, 3.5
  %v737 = vmul.f32 %v721, 3.5
  %v738 = vmul.f32 %v722, 3.5
  %v739 = vmul.f32 %v723, 3.5
  %v740 = vmul.f32 %v724, 3.5
  %v741 = vmul.f32 %v725, 3.5
  %v742 = vmul.f32 %v726, 3.5
  %v743 = vmul.f32 %v727, 3.5
  %v744 = vmul.f32 %v728, 3.5
  %v745 = vmul.f32 %v729, 3.5
  %v746 = vmul.f32 %v730, 3.5
  %v747 = vmul.f32 %v731, 3.5
  %v748 = vmul.f32 %v732, 3.5
  %v749 = vadd.f32 %v733, -5.0
  %v750 = vadd.f32 %v734, -5.0
  %v751 = vadd.f32 %v735, -5.0
  %v752 = vadd.f32 %v736, -5.0
  %v753 = vadd.f32 %v737, -5.0
  %v754 = vadd.f32 %v738, -5.0
  %v755 = vadd.f32 %v739, -5.0
  %v756 = vadd.f32 %v740, -5.0
  %v757 = vadd.f32 %v741, -5.0
  %v758 = vadd.f32 %v742, -5.0
  %v759 = vadd.f32 %v743, -5.0
  %v760 = vadd.f32 %v744, -5.0
  %v761 = vadd.f32 %v745, -5.0
  %v762 = vadd.f32 %v746, -5.0
  %v763 = vadd.f32 %v747, -5.0
  %v764 = vadd.f32 %v748, -5.0
  %v765 = vmul.f32 %v749, 1.442695
  %v766 = vpow.pop %v765
  %v767 = vmul.f32 %v750, 1.442695
  %v768 = vpow.pop %v767
  %v769 = vmul.f32 %v751, 1.442695
  %v770 = vpow.pop %v769
  %v771 = vmul.f32 %v752, 1.442695
  %v772 = vpow.pop %v771
  %v773 = vmul.f32 %v753, 1.442695
  %v774 = vpow.pop %v773
  %v775 = vmul.f32 %v754, 1.442695
  %v776 = vpow.pop %v775
  %v777 = vmul.f32 %v755, 1.442695
  %v778 = vpow.pop %v777
  %v779 = vmul.f32 %v756, 1.442695
  %v780 = vpow.pop %v779
  %v781 = vmul.f32 %v757, 1.442695
  %v782 = vpow.pop %v781
  %v783 = vmul.f32 %v758, 1.442695
  %v784 = vpow.pop %v783
  %v785 = vmul.f32 %v759, 1.442695
  %v786 = vpow.pop %v785
  %v787 = vmul.f32 %v760, 1.442695
  %v788 = vpow.pop %v787
  %v789 = vmul.f32 %v761, 1.442695
  %v790 = vpow.pop %v789
  %v791 = vmul.f32 %v762, 1.442695
  %v792 = vpow.pop %v791
  %v793 = vmul.f32 %v763, 1.442695
  %v794 = vpow.pop %v793
  %v795 = vmul.f32 %v764, 1.442695
  %v796 = vpow.pop %v795
  %v797 = vsel %vm700, %v766, %v618
  %v798 = vsel %vm700, %v768, %v623
  %v799 = vsel %vm700, %v770, %v628
  %v800 = vsel %vm700, %v772, %v633
  %v801 = vsel %vm700, %v774, %v638
  %v802 = vsel %vm700, %v776, %v643
  %v803 = vsel %vm700, %v778, %v648
  %v804 = vsel %vm700, %v780, %v653
  %v805 = vsel %vm700, %v782, %v658
  %v806 = vsel %vm700, %v784, %v663
  %v807 = vsel %vm700, %v786, %v668
  %v808 = vsel %vm700, %v788, %v673
  %v809 = vsel %vm700, %v790, %v678
  %v810 = vsel %vm700, %v792, %v683
  %v811 = vsel %vm700, %v794, %v688
  %v812 = vsel %vm700, %v796, %v693
  %813 = vst [vmem:[%s7] sm:$0xff] %v797
  %814 = vst [vmem:[%s7 + $0x8] sm:$0xff] %v798
  %815 = vst [vmem:[%s7 + $0x10] sm:$0xff] %v799
  %816 = vst [vmem:[%s7 + $0x18] sm:$0xff] %v800
  %817 = vst [vmem:[%s7 + $0x20] sm:$0xff] %v801
  %818 = vst [vmem:[%s7 + $0x28] sm:$0xff] %v802
  %819 = vst [vmem:[%s7 + $0x30] sm:$0xff] %v803
  %820 = vst [vmem:[%s7 + $0x38] sm:$0xff] %v804
  %821 = vst [vmem:[%s7 + $0x40] sm:$0xff] %v805
  %822 = vst [vmem:[%s7 + $0x48] sm:$0xff] %v806
  %823 = vst [vmem:[%s7 + $0x50] sm:$0xff] %v807
  %824 = vst [vmem:[%s7 + $0x58] sm:$0xff] %v808
  %825 = vst [vmem:[%s7 + $0x60] sm:$0xff] %v809
  %826 = vst [vmem:[%s7 + $0x68] sm:$0xff] %v810
  %827 = vst [vmem:[%s7 + $0x70] sm:$0xff] %v811
  %828 = vst [vmem:[%s7 + $0x78] sm:$0xff] %v812
  // Predicated region
  $region30: #{diag_gaussian_actor_forward.1} parent=0 // pred_check
    _
  $region31: #{diag_gaussian_actor_forward.1} parent=0 // pred_check_branch
    %830 = sbr.rel (0) target = $region33
  $region32: #{diag_gaussian_actor_forward.1} parent=0 // pred_region
    _
  $region33: #{diag_gaussian_actor_forward.1} parent=0 // pred_fallthru
    _
  // Predicated region
  $region34: #{diag_gaussian_actor_forward.1} parent=0 // pred_check
    _
  $region35: #{diag_gaussian_actor_forward.1} parent=0 // pred_check_branch
    %832 = sbr.rel (0) target = $region37
  $region36: #{diag_gaussian_actor_forward.1} parent=0 // pred_region
    _
  $region37: #{diag_gaussian_actor_forward.1} parent=0 // pred_fallthru
    _

</llo_original>
